<compile_context>
chip_gen: v7x
topology: tpu7x:2x2x1
jax: 0.10.0
libtpu: 0.0.40
codegen_flags: <defaults>
</compile_context>

<pallas_src>
import math

import jax
import jax.numpy as jnp
from jax.experimental import pallas as pl
from jax.experimental.pallas import tpu as pltpu


_BLOCK_BUDGET_BYTES = 6 * 1024 * 1024     # per-buffer tile budget
_VMEM_LIMIT_CAP = 48 * 1024 * 1024        # stays under v7x's 64 MiB physical VMEM


# ------------------------------ kernels ------------------------------------

def _pe_add_flat_kernel(x_ref, pe_ref, o_ref):
    # x_ref / o_ref: (tile_B, tile_L); pe_ref: (1, tile_L) reused across the
    # inner batch grid axis (block index depends only on the L chunk).
    o_ref[...] = x_ref[...] + pe_ref[...]


def _pe_add_3d_kernel(x_ref, pe_ref, o_ref):
    # x_ref / o_ref: (1, tile_S, D); pe_ref: (tile_S, D) reused across batch.
    o_ref[...] = x_ref[...] + pe_ref[...][None]


# ----------------------------- PE table ------------------------------------

_PE_CACHE = {}


def _make_pe_table(seq_len: int, dmodel: int, dtype) -> jax.Array:
    # Matches the PyTorch module's gen_pe (requires even dmodel, as PyTorch does).
    assert dmodel % 2 == 0, "PositionEncoder requires an even dmodel"
    key = (seq_len, dmodel, jnp.dtype(dtype).name)
    pe = _PE_CACHE.get(key)
    if pe is None:
        pos = jnp.arange(seq_len, dtype=jnp.float32)[:, None]                 # (S, 1)
        dt = jnp.exp(jnp.arange(0, dmodel, 2, dtype=jnp.float32)
                     / float(dmodel) * (-math.log(10000.0)))                  # (D//2,)
        angle = pos * dt                                                      # (S, D//2)
        pe = jnp.zeros((seq_len, dmodel), dtype=jnp.float32)
        pe = pe.at[:, 0::2].set(jnp.sin(angle))
        pe = pe.at[:, 1::2].set(jnp.cos(angle))
        pe = pe.astype(dtype)
        _PE_CACHE[key] = pe
    return pe


# ------------------------------ helpers ------------------------------------

def _sublane(itemsize: int) -> int:
    # Rows per packed sublane group: 8 (f32/i32), 16 (bf16/f16), 32 (int8/fp8).
    return max(8, 32 // itemsize)


def _vmem_limit_bytes(*block_bytes: int) -> int:
    # Everything is double-buffered by the BlockSpec pipeline.
    need = sum(2 * b for b in block_bytes)
    return int(min(max(2 * need, 16 * 1024 * 1024), _VMEM_LIMIT_CAP))


# ------------------------------ wrapper ------------------------------------

def position_encoder(x: jax.Array, *,
                     block_budget_bytes: int = _BLOCK_BUDGET_BYTES) -> jax.Array:
    """x: (B, S, D) -> x + sinusoidal positional encoding, same shape/dtype."""
    B, S, D = x.shape
    pe = _make_pe_table(S, D, x.dtype)                                        # (S, D)
    itemsize = jnp.dtype(x.dtype).itemsize
    sub = _sublane(itemsize)
    L = S * D

    # ------- choose the lane-dense flat tiling (primary path) --------------
    if L * itemsize * sub <= block_budget_bytes:
        tile_L = L                              # full row(s) fit in a block
    elif L % 128 == 0:
        tile_L = (block_budget_bytes // (sub * itemsize)) // 128 * 128
        tile_L = min(L, max(128, tile_L))       # lane-aligned L chunks
    else:
        tile_L = None                           # rare: fall through to 3-D path

    if tile_L is not None:
        x2 = x.reshape(B, L)
        pe2 = pe.reshape(1, L)

        tile_B_raw = block_budget_bytes // (tile_L * itemsize)
        if tile_B_raw >= B:
            tile_B = B                          # full batch dim -> always legal
        else:
            # Round DOWN to the sublane packing; by construction
            # tile_L * itemsize * sub <= budget, so tile_B_raw >= sub and the
            # block can never exceed the budget.
            tile_B = max(sub, (tile_B_raw // sub) * sub)

        x_block = tile_B * tile_L * itemsize
        pe_block = tile_L * itemsize

        out = pl.pallas_call(
            _pe_add_flat_kernel,
            out_shape=jax.ShapeDtypeStruct((B, L), x.dtype),
            grid_spec=pltpu.PrefetchScalarGridSpec(
                num_scalar_prefetch=0,
                # L outer, batch inner: the PE block index is constant across
                # the inner batch axis -> PE tile stays resident in VMEM.
                grid=(pl.cdiv(L, tile_L), pl.cdiv(B, tile_B)),
                in_specs=[
                    pl.BlockSpec((tile_B, tile_L), lambda l, b: (b, l)),
                    pl.BlockSpec((1, tile_L), lambda l, b: (0, l)),
                ],
                out_specs=pl.BlockSpec((tile_B, tile_L), lambda l, b: (b, l)),
            ),
            compiler_params=pltpu.CompilerParams(
                dimension_semantics=("parallel", "parallel"),
                vmem_limit_bytes=_vmem_limit_bytes(x_block, pe_block, x_block)),
        )(x2, pe2)
        return out.reshape(B, S, D)

    # ------- 3-D fallback (L not lane-aligned and too big for one block) ----
    rows = (block_budget_bytes // (D * itemsize)) // sub * sub
    rows = max(sub, rows)
    tile_S = min(S, rows)                       # tile_S == S or multiple of 8
    x_block = tile_S * D * itemsize
    pe_block = tile_S * D * itemsize

    return pl.pallas_call(
        _pe_add_3d_kernel,
        out_shape=jax.ShapeDtypeStruct((B, S, D), x.dtype),
        grid_spec=pltpu.PrefetchScalarGridSpec(
            num_scalar_prefetch=0,
            # s outer, b inner: PE block constant across the batch axis.
            grid=(pl.cdiv(S, tile_S), B),
            in_specs=[
                pl.BlockSpec((1, tile_S, D), lambda s, b: (b, s, 0)),
                pl.BlockSpec((tile_S, D), lambda s, b: (s, 0)),
            ],
            out_specs=pl.BlockSpec((1, tile_S, D), lambda s, b: (b, s, 0)),
        ),
        compiler_params=pltpu.CompilerParams(
            dimension_semantics=("parallel", "parallel"),
            vmem_limit_bytes=_vmem_limit_bytes(x_block, pe_block, x_block)),
    )(x, pe)


# ----------------------------- reference -----------------------------------

def _reference(x: jax.Array) -> jax.Array:
    _, S, D = x.shape
    return x + _make_pe_table(S, D, x.dtype)[None]


if __name__ == "__main__":
    key = jax.random.PRNGKey(0)
    B, S, D = 2, 8, 32
    x = jax.random.normal(key, (B, S, D), dtype=jnp.float32)

    out = jax.block_until_ready(position_encoder(x))
    assert out.shape == (B, S, D)
    assert jnp.allclose(out, _reference(x), atol=1e-5, rtol=1e-5)

    # Exercise the L-chunked lane-dense path (tiny budget forces 128-wide chunks).
    x2 = jax.random.normal(jax.random.PRNGKey(1), (16, 8, 32), dtype=jnp.float32)
    out2 = jax.block_until_ready(position_encoder(x2, block_budget_bytes=4096))
    assert jnp.allclose(out2, _reference(x2), atol=1e-5, rtol=1e-5)

    # Exercise the 3-D fallback (L = 320 not a multiple of 128, over tiny budget).
    x3 = jax.random.normal(jax.random.PRNGKey(2), (2, 16, 20), dtype=jnp.float32)
    out3 = jax.block_until_ready(position_encoder(x3, block_budget_bytes=4096))
    assert jnp.allclose(out3, _reference(x3), atol=1e-5, rtol=1e-5)

    print("KERNEL_OK")
</pallas_src>

<mosaic_0001>
module attributes {stable_mosaic.version = 11 : i64} {
  func.func @_pe_add_flat_kernel(%arg0: i32, %arg1: i32, %arg2: memref<2x256xf32, #tpu.memory_space<vmem>>, %arg3: memref<1x256xf32, #tpu.memory_space<vmem>>, %arg4: memref<2x256xf32, #tpu.memory_space<vmem>>) attributes {dimension_semantics = [#tpu.dimension_semantics<parallel>, #tpu.dimension_semantics<parallel>], iteration_bounds = array<i64: 1, 1>, scalar_prefetch = 0 : i64, scratch_operands = 0 : i64, tpu.core_type = #tpu.core_type<tc>, window_params = [{transform_indices = @transform_0, window_bounds = array<i64: 2, 256>}, {transform_indices = @transform_1, window_bounds = array<i64: 1, 256>}, {transform_indices = @transform_2, window_bounds = array<i64: 2, 256>}]} {
    %c0 = arith.constant 0 : index
    %c0_0 = arith.constant 0 : index
    %0 = vector.load %arg2[%c0, %c0_0] : memref<2x256xf32, #tpu.memory_space<vmem>>, vector<2x256xf32>
    %c0_1 = arith.constant 0 : index
    %c0_2 = arith.constant 0 : index
    %1 = vector.load %arg3[%c0_1, %c0_2] : memref<1x256xf32, #tpu.memory_space<vmem>>, vector<1x256xf32>
    %2 = vector.broadcast %1 : vector<1x256xf32> to vector<2x256xf32>
    %3 = arith.addf %0, %2 : vector<2x256xf32>
    %c0_3 = arith.constant 0 : index
    %c0_4 = arith.constant 0 : index
    %4 = vector.load %arg4[%c0_3, %c0_4] : memref<2x256xf32, #tpu.memory_space<vmem>>, vector<2x256xf32>
    tpu.vector_store %arg4[%c0_3, %c0_4], %3 {strides = array<i32>} : memref<2x256xf32, #tpu.memory_space<vmem>>, vector<2x256xf32>,
    return
  }
  func.func @transform_0(%arg0: i32, %arg1: i32) -> (i32, i32) {
    %c0_i32 = arith.constant 0 : i32
    return %arg1, %arg0 : i32, i32
  }
  func.func @transform_1(%arg0: i32, %arg1: i32) -> (i32, i32) {
    %c0_i32 = arith.constant 0 : i32
    %c0_i32_0 = arith.constant 0 : i32
    return %c0_i32, %arg0 : i32, i32
  }
  func.func @transform_2(%arg0: i32, %arg1: i32) -> (i32, i32) {
    %c0_i32 = arith.constant 0 : i32
    return %arg1, %arg0 : i32, i32
  }
}

</mosaic_0001>

<llo_original>
// kernel: tpu_custom_call.1
$region0: #{tpu_custom_call.1}
  #allocation0 [shape = 'u32[]', space=smem, size = 0x4, offset = 0x4, fixed_abs, tag = 'smem constant byte address 0x4 - core index']
  #allocation1 [shape = 'u32[144,128]{1,0:T(1,128)}', space=vmem, size = 0x12000, scoped, tag = 'internal scratch']
  %s0 = inlined_call_operand.hbm [shape: f32[2,256], index: 0, kind: input, shape index: {}]
  %s1 = inlined_call_operand.vmem [shape: f32[1,256], index: 1, kind: input, shape index: {}]
  %s2 = inlined_call_operand.hbm [shape: f32[2,256], index: 2, kind: output, shape index: {}]
  %s3 = sld [smem:[#allocation0]]
  $region22: #{tpu_custom_call.1} parent=0
    _
  %s5 = ssub.s32 1, %s3
  %s6 = scalar_select 0, %s5, %s3
  $region1: #{tpu_custom_call.1} parent=0
    #allocation2 [shape = 'u8[2048]{0}', space=vmem, size = 0x800, scoped, tag = 'input window, operand 0, single buffered']
    #allocation3 [shape = 's32[1]{0}', space=sflag, size = 0x4, scoped, tag = 'scoped memory for tpu_custom_call.1']
    #allocation4 [shape = 's32[1]{0}', space=sflag, size = 0x4, scoped, tag = 'scoped memory for tpu_custom_call.1']
    #allocation5 [shape = 'u8[2048]{0}', space=vmem, size = 0x800, scoped, tag = 'output window, operand 0, single buffered']
    %7 = vsyncpa [#allocation3], 0
    %8 = vsyncpa [#allocation4], 0
    // Predicated region
    $region2: #{tpu_custom_call.1} parent=1 // pred_check
      _
    $region3: #{tpu_custom_call.1} parent=1 // pred_check_branch
      %10 = sbr.rel (0) target = $region5
    $region4: #{tpu_custom_call.1} parent=1 // pred_region
      %s12 = ssub.s32 64, 64
      %13 = vsyncadd [#allocation3], %s12
      %s15 = sshll.u32 [#allocation2], 4
      %s16 = int_to_ptr.vmem [resolvable:$true] %s15
      %18 = dma.hbm_to_vmem [thread:$0]  %s0, 64, %s16, [#allocation3]
    $region5: #{tpu_custom_call.1} parent=1 // pred_fallthru
      _
    // Predicated region
    $region6: #{tpu_custom_call.1} parent=1 // pred_check
      _
    $region7: #{tpu_custom_call.1} parent=1 // pred_check_branch
      %20 = sbr.rel (0) target = $region9
    $region8: #{tpu_custom_call.1} parent=1 // pred_region
      _
    $region9: #{tpu_custom_call.1} parent=1 // pred_fallthru
      _
    // Predicated region
    $region10: #{tpu_custom_call.1} parent=1 // pred_check
      _
    $region11: #{tpu_custom_call.1} parent=1 // pred_check_branch
      %22 = sbr.rel (0) target = $region13
    $region12: #{tpu_custom_call.1} parent=1 // pred_region
      %23 = dma.done [#allocation3], 64
    $region13: #{tpu_custom_call.1} parent=1 // pred_fallthru
      _
    %v24 = vld [vmem:[#allocation2] sm:$0xf]
    %v25 = vld [vmem:[%s1] sm:$0x3]
    %v27 = vlaneseq
    %v28 = vshrl.u32 %v27, 7
    %v29 = vsub.s32 0, %v28
    %v30 = vrot.slane %v25, %v29
    %v31 = vlaneseq
    %v32 = vshrl.u32 %v31, 7
    %v33 = vsub.s32 1, %v32
    %v34 = vrot.slane %v25, %v33
    %v35 = vcombine.low %v30, %v34
    %v37 = vunpack.c.l.s4 1983009808
    %v38 = vunpack.c.0.s8 %v37
    %v39 = vlaneseq
    %v40 = vshrl.u32 %v39, 7
    %v41 = vsub.s32 %v38, %v40
    %v42 = vrot.slane %v35, %v41
    %v44 = vadd.f32 %v24, %v42
    %45 = vst [vmem:[#allocation5] sm:$0xf] %v44
    // Predicated region
    $region14: #{tpu_custom_call.1} parent=1 // pred_check
      _
    $region15: #{tpu_custom_call.1} parent=1 // pred_check_branch
      %47 = sbr.rel (0) target = $region17
    $region16: #{tpu_custom_call.1} parent=1 // pred_region
      %s49 = ssub.s32 64, 64
      %50 = vsyncadd [#allocation4], %s49
      %s52 = sshll.u32 [#allocation5], 4
      %s53 = int_to_ptr.vmem [resolvable:$true] %s52
      %55 = dma.vmem_to_hbm [thread:$0]  %s53, 64, %s2, [#allocation4]
    $region17: #{tpu_custom_call.1} parent=1 // pred_fallthru
      _
    // Predicated region
    $region18: #{tpu_custom_call.1} parent=1 // pred_check
      _
    $region19: #{tpu_custom_call.1} parent=1 // pred_check_branch
      %57 = sbr.rel (0) target = $region21
    $region20: #{tpu_custom_call.1} parent=1 // pred_region
      %58 = dma.done [#allocation4], 64
    $region21: #{tpu_custom_call.1} parent=1 // pred_fallthru
      _
    %59 = vsyncpa [#allocation3], 1
    %60 = vsyncpa [#allocation4], 1

</llo_original>
